<compile_context>
chip_gen: v5e
topology: v5e:2x2
jax: 0.10.0
libtpu: 0.0.40
codegen_flags: <defaults>
</compile_context>

<pallas_src>
import functools

import jax
import jax.numpy as jnp
from jax import lax
from jax.experimental import pallas as pl
from jax.experimental.pallas import tpu as pltpu


def _leaky_relu(x, slope=0.2):
    return jnp.where(x >= 0, x, slope * x)


def _round_up(v, m):
    return -(-int(v) // int(m)) * int(m)


def gcl_rf_vel_kernel(row_ref, col_ref, ea_ref, x_ref, vel_norm_ref, vel_ref,
                      inv_deg_ref, wp1_ref, bp1_ref, wp2_ref,
                      wv1_ref, bv1_ref, wv2_ref, bv2_ref,
                      out_ref, iota_ref, *, coords_weight, n_attr):
    t = pl.program_id(0)
    n_pad = x_ref.shape[1]            # padded node count (lanes of node tensors)
    tile_e = row_ref.shape[1]         # edges per tile (lane axis)

    # Node-index iota is identical for every edge tile -> build once, reuse.
    @pl.when(t == 0)
    def _fill_iota():
        iota_ref[...] = lax.broadcasted_iota(jnp.int32, (n_pad, tile_e), 0)

    x_t = x_ref[...]                                            # [Dp, Np]
    node_iota = iota_ref[...]                                   # [Np, T]

    # In-vreg one-hots (never touch HBM): oh[n, e] = (endpoint(e) == n).
    oh_row = (node_iota == row_ref[...]).astype(jnp.float32)    # [Np, T]
    oh_col = (node_iota == col_ref[...]).astype(jnp.float32)    # [Np, T]
    oh_diff = oh_row - oh_col                                   # [Np, T]

    # Fused gather on the MXU: x_diff = x[row] - x[col] in ONE contraction.
    x_diff = jnp.dot(x_t, oh_diff, preferred_element_type=jnp.float32)   # [Dp, T]
    radial = jnp.sqrt(jnp.sum(x_diff * x_diff, axis=0, keepdims=True))   # [1, T]

    # phi on the VPU/EUP: Linear(1+A, nf) -> LeakyReLU(0.2) -> Linear(nf, 1) -> Tanh.
    # (K in {1, 2} and output width 1 would waste >98% of an MXU pass.)
    wp1 = wp1_ref[...]                                          # [nf, 1+A]
    h = wp1[:, 0:1] * radial + bp1_ref[...]                     # [nf, T]
    for a in range(n_attr):
        h = h + wp1[:, 1 + a:2 + a] * ea_ref[a:a + 1, :]
    h = _leaky_relu(h)
    e_out = jnp.tanh(jnp.sum(wp2_ref[...] * h, axis=0, keepdims=True))   # [1, T]
    m_ij = x_diff * e_out                                       # [Dp, T]

    # Scatter-add this tile into the resident accumulator (MXU, contract over T).
    scat = lax.dot_general(m_ij, oh_row, (((1,), (1,)), ((), ())),
                           preferred_element_type=jnp.float32)  # [Dp, Np]

    @pl.when(t == 0)
    def _first():
        out_ref[...] = scat            # direct write; no zero-init + RMW

    @pl.when(t > 0)
    def _accum():
        out_ref[...] += scat

    @pl.when(t == pl.num_programs(0) - 1)
    def _finalize():
        # segment mean = raw sum * precomputed 1 / max(degree, 1)
        agg = out_ref[...] * inv_deg_ref[...]                   # [Dp, Np]
        # coord_mlp_vel on the VPU: Linear(1, nf) -> LeakyReLU -> Linear(nf, 1)
        hv = _leaky_relu(wv1_ref[...] * vel_norm_ref[...] + bv1_ref[...])   # [nf, Np]
        s = jnp.sum(wv2_ref[...] * hv, axis=0, keepdims=True) + bv2_ref[...]  # [1, Np]
        out_ref[...] = x_t + agg * coords_weight + vel_ref[...] * s


def _pick_tile_e(n_pad, d_pad, nf, a_eff, budget_bytes, max_tile=2048):
    """Largest 128-multiple tile_e whose VMEM footprint fits the budget."""
    resident = 2 * (3 * d_pad + 2) * n_pad * 4                  # x, vel, out, vel_norm, inv_deg
    # per-edge-column bytes: iota + oh_row + oh_col + oh_diff (4 * Np),
    # x_diff/m_ij (2 * Dp), h (nf) + small rows, double-buffered edge streams.
    per_col = (4 * n_pad + 2 * d_pad + nf + 4 + 2 * (2 + a_eff)) * 4
    avail = max(budget_bytes - resident, 0)
    tile = (avail // max(per_col, 1)) // 128 * 128
    return int(max(128, min(tile, max_tile)))


def gcl_rf_vel(x, vel_norm, vel, edge_index, edge_attr, params,
               coords_weight=1.0, tile_e=None, node_align=128,
               vmem_budget_bytes=40 * 1024 * 1024):
    """Pallas wrapper reproducing GCL_rf_vel.forward; returns (x_out, edge_attr)."""
    n, d = x.shape
    row, col = edge_index
    e = int(row.shape[0])
    a = int(edge_attr.shape[1]) if edge_attr is not None else 0
    a_eff = max(a, 1)
    nf = int(params["wp1"].shape[1])
    f32 = jnp.float32

    d_pad = max(8, _round_up(d, 8))                    # pad coord dim to 8 sublanes
    n_pad = max(node_align, _round_up(n, node_align))  # lane-dense node axis

    if tile_e is None:
        tile_e = _pick_tile_e(n_pad, d_pad, nf, a_eff, vmem_budget_bytes)
    tile_e = max(128, (int(tile_e) // 128) * 128)
    # no point making a tile larger than the (128-rounded) edge count
    tile_e = min(tile_e, max(128, _round_up(e, 128)))
    e_pad = max(tile_e, _round_up(e, tile_e))          # >= 1 tile even if E == 0
    num_tiles = e_pad // tile_e
    pad_e = e_pad - e

    # Padded edges point at node 0 on both endpoints -> oh_diff = 0 -> m_ij = 0,
    # so they contribute nothing to the segment sum (degrees use real edges only).
    row_p = jnp.pad(row.astype(jnp.int32), (0, pad_e)).reshape(1, e_pad)
    col_p = jnp.pad(col.astype(jnp.int32), (0, pad_e)).reshape(1, e_pad)
    if a > 0:
        ea_t = jnp.pad(edge_attr.astype(f32), ((0, pad_e), (0, 0))).T     # [A, E_pad]
    else:
        ea_t = jnp.zeros((1, e_pad), f32)                                 # dummy lane-dense block

    # Node tensors, transposed and zero-padded (fake nodes: x=vel=vel_norm=0, inv_deg=0).
    x_t = jnp.pad(x.astype(f32).T, ((0, d_pad - d), (0, n_pad - n)))      # [Dp, Np]
    vel_t = jnp.pad(vel.astype(f32).T, ((0, d_pad - d), (0, n_pad - n)))  # [Dp, Np]
    vel_norm_t = jnp.pad(vel_norm.astype(f32).reshape(1, n),
                         ((0, 0), (0, n_pad - n)))                        # [1, Np]

    # Static per graph: reciprocal clamped degree (padding nodes get 0).
    deg = jax.ops.segment_sum(jnp.ones((e,), f32), row, num_segments=n)
    inv_deg = jnp.pad((1.0 / jnp.maximum(deg, 1.0)).reshape(1, n),
                      ((0, 0), (0, n_pad - n)))                           # [1, Np]

    wp1_t = params["wp1"].astype(f32).T                                   # [nf, 1+A]
    bp1_t = params["bp1"].astype(f32).reshape(nf, 1)
    wp2 = params["wp2"].astype(f32).reshape(nf, 1)
    wv1_t = params["wv1"].astype(f32).reshape(nf, 1)
    bv1_t = params["bv1"].astype(f32).reshape(nf, 1)
    wv2 = params["wv2"].astype(f32).reshape(nf, 1)
    bv2 = params["bv2"].astype(f32).reshape(1, 1)

    def edge_spec(shape):
        return pl.BlockSpec(shape, lambda t: (0, t))     # pipelined edge tiles

    def full_spec(shape):
        return pl.BlockSpec(shape, lambda t: (0, 0))     # resident small tensors

    in_specs = [
        edge_spec((1, tile_e)),            # row indices
        edge_spec((1, tile_e)),            # col indices
        edge_spec((ea_t.shape[0], tile_e)),  # edge_attr^T (or dummy)
        full_spec((d_pad, n_pad)),         # x^T
        full_spec((1, n_pad)),             # vel_norm^T
        full_spec((d_pad, n_pad)),         # vel^T
        full_spec((1, n_pad)),             # inv_deg
        full_spec((nf, 1 + a)),            # wp1^T
        full_spec((nf, 1)),                # bp1
        full_spec((nf, 1)),                # wp2
        full_spec((nf, 1)),                # wv1
        full_spec((nf, 1)),                # bv1
        full_spec((nf, 1)),                # wv2
        full_spec((1, 1)),                 # bv2
    ]
    out_spec = pl.BlockSpec((d_pad, n_pad), lambda t: (0, 0))

    # Scoped-VMEM limit derived from the actual footprint (safe on v5e/v6e/v7x).
    resident = 2 * (3 * d_pad + 2) * n_pad * 4
    per_col = (4 * n_pad + 2 * d_pad + nf + 4 + 2 * (2 + a_eff)) * 4
    footprint = resident + per_col * tile_e
    vmem_limit = int(min(48 << 20, max(32 << 20, footprint + (8 << 20))))

    flops = e_pad * (4 * d_pad * n_pad + 2 * nf * (a + 2) + 10 * d_pad)
    bytes_accessed = 4 * (e_pad * (2 + a_eff) + n_pad * (3 * d_pad + 3)
                          + nf * (a + 6) + 1)
    cost = pl.CostEstimate(flops=flops, transcendentals=2 * e_pad,
                           bytes_accessed=bytes_accessed)

    kernel = functools.partial(gcl_rf_vel_kernel,
                               coords_weight=float(coords_weight),
                               n_attr=a)
    out_t = pl.pallas_call(
        kernel,
        grid=(num_tiles,),
        in_specs=in_specs,
        out_specs=out_spec,
        out_shape=jax.ShapeDtypeStruct((d_pad, n_pad), f32),
        scratch_shapes=[pltpu.VMEM((n_pad, tile_e), jnp.int32)],   # cached node iota
        compiler_params=pltpu.CompilerParams(
            dimension_semantics=("arbitrary",),          # edge axis feeds accumulator
            vmem_limit_bytes=vmem_limit),
        cost_estimate=cost,
    )(row_p, col_p, ea_t, x_t, vel_norm_t, vel_t, inv_deg,
      wp1_t, bp1_t, wp2, wv1_t, bv1_t, wv2, bv2)

    x_out = out_t[:d, :n].T
    return x_out, edge_attr


# --- pure-JAX reference (for correctness check) -------------------------------
def gcl_rf_vel_reference(x, vel_norm, vel, edge_index, edge_attr, params,
                         coords_weight=1.0):
    row, col = edge_index
    n = x.shape[0]
    x_diff = x[row] - x[col]
    radial = jnp.sqrt(jnp.sum(x_diff ** 2, axis=1, keepdims=True))
    e_in = jnp.concatenate([radial, edge_attr], axis=1)
    h = _leaky_relu(e_in @ params["wp1"] + params["bp1"])
    e_out = jnp.tanh(h @ params["wp2"])
    m_ij = x_diff * e_out
    agg_sum = jax.ops.segment_sum(m_ij, row, num_segments=n)
    count = jax.ops.segment_sum(jnp.ones_like(m_ij), row, num_segments=n)
    agg = agg_sum / jnp.maximum(count, 1.0)
    x_out = x + agg * coords_weight
    s = _leaky_relu(vel_norm @ params["wv1"] + params["bv1"]) @ params["wv2"] + params["bv2"]
    return x_out + vel * s


def make_params(key, nf=32, edge_attr_nf=2):
    ks = jax.random.split(key, 6)
    # phi: Linear(1+A, nf) [+bias], Linear(nf, 1) no bias (xavier_uniform, gain=0.001), Tanh
    wp1 = jax.random.uniform(ks[0], (1 + edge_attr_nf, nf), jnp.float32, -0.3, 0.3)
    bp1 = jax.random.uniform(ks[1], (1, nf), jnp.float32, -0.1, 0.1)
    bound2 = 0.001 * (6.0 / (nf + 1)) ** 0.5
    wp2 = jax.random.uniform(ks[2], (nf, 1), jnp.float32, -bound2, bound2)
    # coord_mlp_vel: Linear(1, nf) [+bias], LeakyReLU, Linear(nf, 1) [+bias]
    wv1 = jax.random.uniform(ks[3], (1, nf), jnp.float32, -0.5, 0.5)
    bv1 = jax.random.uniform(ks[4], (1, nf), jnp.float32, -0.1, 0.1)
    wv2 = jax.random.uniform(ks[5], (nf, 1), jnp.float32, -0.2, 0.2)
    bv2 = jnp.zeros((1, 1), jnp.float32)
    return dict(wp1=wp1, bp1=bp1, wp2=wp2, wv1=wv1, bv1=bv1, wv2=wv2, bv2=bv2)


if __name__ == "__main__":
    key = jax.random.PRNGKey(0)
    n_nodes, d, nf, edge_attr_nf = 16, 3, 32, 2

    # fully connected graph without self-loops: E = N*(N-1) = 240
    rows, cols = [], []
    for i in range(n_nodes):
        for j in range(n_nodes):
            if i != j:
                rows.append(i)
                cols.append(j)
    edge_index = (jnp.asarray(rows, jnp.int32), jnp.asarray(cols, jnp.int32))
    n_edges = len(rows)

    k1, k2, k3, kp = jax.random.split(key, 4)
    x = jax.random.normal(k1, (n_nodes, d), jnp.float32)
    vel = jax.random.normal(k2, (n_nodes, d), jnp.float32)
    vel_norm = jnp.linalg.norm(vel, axis=1, keepdims=True)
    edge_attr = jax.random.normal(k3, (n_edges, edge_attr_nf), jnp.float32)
    params = make_params(kp, nf=nf, edge_attr_nf=edge_attr_nf)

    x_ref = gcl_rf_vel_reference(x, vel_norm, vel, edge_index, edge_attr, params,
                                 coords_weight=1.0)

    # tile_e=128 -> E=240 pads to 256 -> grid=(2,): exercises the multi-tile
    # accumulate / finalize path even at this toy size.
    x_out, ea_out = gcl_rf_vel(x, vel_norm, vel, edge_index, edge_attr, params,
                               coords_weight=1.0, tile_e=128)
    x_out = jax.block_until_ready(x_out)
    assert jnp.allclose(x_out, x_ref, atol=1e-4, rtol=1e-4), "mismatch (tile_e=128)"
    assert ea_out.shape == edge_attr.shape

    # Auto tile sizing path (single tile here).
    x_out_auto, _ = gcl_rf_vel(x, vel_norm, vel, edge_index, edge_attr, params,
                               coords_weight=1.0)
    x_out_auto = jax.block_until_ready(x_out_auto)
    assert jnp.allclose(x_out_auto, x_ref, atol=1e-4, rtol=1e-4), "mismatch (auto tile)"

    # Edge-free graph: accumulator init + finalize must still run (E == 0 guard).
    empty_edges = (jnp.zeros((0,), jnp.int32), jnp.zeros((0,), jnp.int32))
    empty_attr = jnp.zeros((0, edge_attr_nf), jnp.float32)
    x_out0, _ = gcl_rf_vel(x, vel_norm, vel, empty_edges, empty_attr, params,
                           coords_weight=1.0)
    x_ref0 = gcl_rf_vel_reference(x, vel_norm, vel, empty_edges, empty_attr, params,
                                  coords_weight=1.0)
    x_out0 = jax.block_until_ready(x_out0)
    assert jnp.allclose(x_out0, x_ref0, atol=1e-4, rtol=1e-4), "mismatch (E == 0)"

    print("KERNEL_OK")
</pallas_src>

<mosaic_0001>
module attributes {stable_mosaic.version = 11 : i64} {
  func.func @gcl_rf_vel_kernel(%arg0: i32, %arg1: memref<1x128xi32, #tpu.memory_space<vmem>>, %arg2: memref<1x128xi32, #tpu.memory_space<vmem>>, %arg3: memref<2x128xf32, #tpu.memory_space<vmem>>, %arg4: memref<8x128xf32, #tpu.memory_space<vmem>>, %arg5: memref<1x128xf32, #tpu.memory_space<vmem>>, %arg6: memref<8x128xf32, #tpu.memory_space<vmem>>, %arg7: memref<1x128xf32, #tpu.memory_space<vmem>>, %arg8: memref<32x3xf32, #tpu.memory_space<vmem>>, %arg9: memref<32x1xf32, #tpu.memory_space<vmem>>, %arg10: memref<32x1xf32, #tpu.memory_space<vmem>>, %arg11: memref<32x1xf32, #tpu.memory_space<vmem>>, %arg12: memref<32x1xf32, #tpu.memory_space<vmem>>, %arg13: memref<32x1xf32, #tpu.memory_space<vmem>>, %arg14: memref<1x1xf32, #tpu.memory_space<vmem>>, %arg15: memref<8x128xf32, #tpu.memory_space<vmem>>, %arg16: memref<128x128xi32, #tpu.memory_space<vmem>>) attributes {dimension_semantics = [#tpu.dimension_semantics<arbitrary>], iteration_bounds = array<i64: 2>, scalar_prefetch = 0 : i64, scratch_operands = 1 : i64, tpu.core_type = #tpu.core_type<tc>, window_params = [{transform_indices = @transform_0, window_bounds = array<i64: 1, 128>}, {transform_indices = @transform_1, window_bounds = array<i64: 1, 128>}, {transform_indices = @transform_2, window_bounds = array<i64: 2, 128>}, {pipeline_mode = #tpu.pipeline_mode<synchronous>, transform_indices = @transform_3, window_bounds = array<i64: 8, 128>}, {pipeline_mode = #tpu.pipeline_mode<synchronous>, transform_indices = @transform_4, window_bounds = array<i64: 1, 128>}, {pipeline_mode = #tpu.pipeline_mode<synchronous>, transform_indices = @transform_5, window_bounds = array<i64: 8, 128>}, {pipeline_mode = #tpu.pipeline_mode<synchronous>, transform_indices = @transform_6, window_bounds = array<i64: 1, 128>}, {pipeline_mode = #tpu.pipeline_mode<synchronous>, transform_indices = @transform_7, window_bounds = array<i64: 32, 3>}, {pipeline_mode = #tpu.pipeline_mode<synchronous>, transform_indices = @transform_8, window_bounds = array<i64: 32, 1>}, {pipeline_mode = #tpu.pipeline_mode<synchronous>, transform_indices = @transform_9, window_bounds = array<i64: 32, 1>}, {pipeline_mode = #tpu.pipeline_mode<synchronous>, transform_indices = @transform_10, window_bounds = array<i64: 32, 1>}, {pipeline_mode = #tpu.pipeline_mode<synchronous>, transform_indices = @transform_11, window_bounds = array<i64: 32, 1>}, {pipeline_mode = #tpu.pipeline_mode<synchronous>, transform_indices = @transform_12, window_bounds = array<i64: 32, 1>}, {pipeline_mode = #tpu.pipeline_mode<synchronous>, transform_indices = @transform_13, window_bounds = array<i64: 1, 1>}, {pipeline_mode = #tpu.pipeline_mode<synchronous>, transform_indices = @transform_14, window_bounds = array<i64: 8, 128>}]} {
    %c0_i32 = arith.constant 0 : i32
    %0 = arith.cmpi eq, %arg0, %c0_i32 : i32
    %1 = arith.extui %0 : i1 to i32
    %c0_i32_0 = arith.constant 0 : i32
    %2 = arith.cmpi ne, %1, %c0_i32_0 : i32
    scf.if %2 {
      %64 = tpu.iota {dimensions = array<i32: 0>} : vector<128x128xi32>
      %c0_27 = arith.constant 0 : index
      %c0_28 = arith.constant 0 : index
      %65 = vector.load %arg16[%c0_27, %c0_28] : memref<128x128xi32, #tpu.memory_space<vmem>>, vector<128x128xi32>
      tpu.vector_store %arg16[%c0_27, %c0_28], %64 {strides = array<i32>} : memref<128x128xi32, #tpu.memory_space<vmem>>, vector<128x128xi32>,
    } else {
    }
    %c0 = arith.constant 0 : index
    %c0_1 = arith.constant 0 : index
    %3 = vector.load %arg4[%c0, %c0_1] : memref<8x128xf32, #tpu.memory_space<vmem>>, vector<8x128xf32>
    %c0_2 = arith.constant 0 : index
    %c0_3 = arith.constant 0 : index
    %4 = vector.load %arg16[%c0_2, %c0_3] : memref<128x128xi32, #tpu.memory_space<vmem>>, vector<128x128xi32>
    %c0_4 = arith.constant 0 : index
    %c0_5 = arith.constant 0 : index
    %5 = vector.load %arg1[%c0_4, %c0_5] : memref<1x128xi32, #tpu.memory_space<vmem>>, vector<1x128xi32>
    %6 = vector.broadcast %5 : vector<1x128xi32> to vector<128x128xi32>
    %7 = arith.cmpi eq, %4, %6 : vector<128x128xi32>
    %8 = arith.extui %7 : vector<128x128xi1> to vector<128x128xi32>
    %9 = arith.sitofp %8 : vector<128x128xi32> to vector<128x128xf32>
    %c0_6 = arith.constant 0 : index
    %c0_7 = arith.constant 0 : index
    %10 = vector.load %arg2[%c0_6, %c0_7] : memref<1x128xi32, #tpu.memory_space<vmem>>, vector<1x128xi32>
    %11 = vector.broadcast %10 : vector<1x128xi32> to vector<128x128xi32>
    %12 = arith.cmpi eq, %4, %11 : vector<128x128xi32>
    %13 = arith.extui %12 : vector<128x128xi1> to vector<128x128xi32>
    %14 = arith.sitofp %13 : vector<128x128xi32> to vector<128x128xf32>
    %15 = arith.subf %9, %14 : vector<128x128xf32>
    %cst = arith.constant dense<0.000000e+00> : vector<8x128xf32>
    %16 = tpu.matmul %3, %15, %cst {dimension_numbers = #tpu.dot_dimension_numbers<[1], [0], [0], [1], [0, 0, 1, 1], [], []>} : vector<8x128xf32>, vector<128x128xf32>, vector<8x128xf32> -> vector<8x128xf32>
    %17 = arith.mulf %16, %16 : vector<8x128xf32>
    %cst_8 = arith.constant dense<0.000000e+00> : vector<128xf32>
    %18 = vector.multi_reduction <add>, %17, %cst_8 [0] : vector<8x128xf32> to vector<128xf32>
    %19 = vector.shape_cast %18 : vector<128xf32> to vector<1x128xf32>
    %20 = math.sqrt %19 : vector<1x128xf32>
    %c0_9 = arith.constant 0 : index
    %c0_10 = arith.constant 0 : index
    %21 = vector.load %arg8[%c0_9, %c0_10] : memref<32x3xf32, #tpu.memory_space<vmem>>, vector<32x3xf32>
    %22 = vector.extract_strided_slice %21 {offsets = [0, 0], sizes = [32, 1], strides = [1, 1]} : vector<32x3xf32> to vector<32x1xf32>
    %23 = vector.broadcast %22 : vector<32x1xf32> to vector<32x128xf32>
    %24 = vector.broadcast %20 : vector<1x128xf32> to vector<32x128xf32>
    %25 = arith.mulf %23, %24 : vector<32x128xf32>
    %c0_11 = arith.constant 0 : index
    %c0_12 = arith.constant 0 : index
    %26 = vector.load %arg9[%c0_11, %c0_12] : memref<32x1xf32, #tpu.memory_space<vmem>>, vector<32x1xf32>
    %27 = vector.broadcast %26 : vector<32x1xf32> to vector<32x128xf32>
    %28 = arith.addf %25, %27 : vector<32x128xf32>
    %29 = vector.extract_strided_slice %21 {offsets = [0, 1], sizes = [32, 1], strides = [1, 1]} : vector<32x3xf32> to vector<32x1xf32>
    %c0_13 = arith.constant 0 : index
    %c0_14 = arith.constant 0 : index
    %30 = vector.load %arg3[%c0_13, %c0_14] : memref<2x128xf32, #tpu.memory_space<vmem>>, vector<1x128xf32>
    %31 = vector.broadcast %29 : vector<32x1xf32> to vector<32x128xf32>
    %32 = vector.broadcast %30 : vector<1x128xf32> to vector<32x128xf32>
    %33 = arith.mulf %31, %32 : vector<32x128xf32>
    %34 = arith.addf %28, %33 : vector<32x128xf32>
    %35 = vector.extract_strided_slice %21 {offsets = [0, 2], sizes = [32, 1], strides = [1, 1]} : vector<32x3xf32> to vector<32x1xf32>
    %c1 = arith.constant 1 : index
    %c0_15 = arith.constant 0 : index
    %36 = vector.load %arg3[%c1, %c0_15] : memref<2x128xf32, #tpu.memory_space<vmem>>, vector<1x128xf32>
    %37 = vector.broadcast %35 : vector<32x1xf32> to vector<32x128xf32>
    %38 = vector.broadcast %36 : vector<1x128xf32> to vector<32x128xf32>
    %39 = arith.mulf %37, %38 : vector<32x128xf32>
    %40 = arith.addf %34, %39 : vector<32x128xf32>
    %cst_16 = arith.constant 0.000000e+00 : f32
    %41 = vector.broadcast %cst_16 : f32 to vector<32x128xf32>
    %42 = arith.cmpf oge, %40, %41 : vector<32x128xf32>
    %cst_17 = arith.constant 2.000000e-01 : f32
    %43 = vector.broadcast %cst_17 : f32 to vector<32x128xf32>
    %44 = arith.mulf %43, %40 : vector<32x128xf32>
    %45 = arith.select %42, %40, %44 : vector<32x128xi1>, vector<32x128xf32>
    %c0_18 = arith.constant 0 : index
    %c0_19 = arith.constant 0 : index
    %46 = vector.load %arg10[%c0_18, %c0_19] : memref<32x1xf32, #tpu.memory_space<vmem>>, vector<32x1xf32>
    %47 = vector.broadcast %46 : vector<32x1xf32> to vector<32x128xf32>
    %48 = arith.mulf %47, %45 : vector<32x128xf32>
    %cst_20 = arith.constant dense<0.000000e+00> : vector<128xf32>
    %49 = vector.multi_reduction <add>, %48, %cst_20 [0] : vector<32x128xf32> to vector<128xf32>
    %50 = vector.shape_cast %49 : vector<128xf32> to vector<1x128xf32>
    %51 = math.tanh %50 : vector<1x128xf32>
    %52 = vector.broadcast %51 : vector<1x128xf32> to vector<8x128xf32>
    %53 = arith.mulf %16, %52 : vector<8x128xf32>
    %cst_21 = arith.constant dense<0.000000e+00> : vector<8x128xf32>
    %54 = tpu.matmul %53, %9, %cst_21 {dimension_numbers = #tpu.dot_dimension_numbers<[1], [1], [0], [0], [0, 0, 1, 0], [], []>} : vector<8x128xf32>, vector<128x128xf32>, vector<8x128xf32> -> vector<8x128xf32>
    %c0_i32_22 = arith.constant 0 : i32
    %55 = arith.cmpi eq, %arg0, %c0_i32_22 : i32
    %56 = arith.extui %55 : i1 to i32
    %c0_i32_23 = arith.constant 0 : i32
    %57 = arith.cmpi ne, %56, %c0_i32_23 : i32
    scf.if %57 {
      %c0_27 = arith.constant 0 : index
      %c0_28 = arith.constant 0 : index
      %64 = vector.load %arg15[%c0_27, %c0_28] : memref<8x128xf32, #tpu.memory_space<vmem>>, vector<8x128xf32>
      tpu.vector_store %arg15[%c0_27, %c0_28], %54 {strides = array<i32>} : memref<8x128xf32, #tpu.memory_space<vmem>>, vector<8x128xf32>,
    } else {
    }
    %c0_i32_24 = arith.constant 0 : i32
    %58 = arith.cmpi sgt, %arg0, %c0_i32_24 : i32
    %59 = arith.extui %58 : i1 to i32
    %c0_i32_25 = arith.constant 0 : i32
    %60 = arith.cmpi ne, %59, %c0_i32_25 : i32
    scf.if %60 {
      %c0_27 = arith.constant 0 : index
      %c0_28 = arith.constant 0 : index
      %64 = vector.load %arg15[%c0_27, %c0_28] : memref<8x128xf32, #tpu.memory_space<vmem>>, vector<8x128xf32>
      %65 = arith.addf %64, %54 : vector<8x128xf32>
      %c0_29 = arith.constant 0 : index
      %c0_30 = arith.constant 0 : index
      %66 = vector.load %arg15[%c0_29, %c0_30] : memref<8x128xf32, #tpu.memory_space<vmem>>, vector<8x128xf32>
      tpu.vector_store %arg15[%c0_29, %c0_30], %65 {strides = array<i32>} : memref<8x128xf32, #tpu.memory_space<vmem>>, vector<8x128xf32>,
    } else {
    }
    %c1_i32 = arith.constant 1 : i32
    %61 = arith.cmpi eq, %arg0, %c1_i32 : i32
    %62 = arith.extui %61 : i1 to i32
    %c0_i32_26 = arith.constant 0 : i32
    %63 = arith.cmpi ne, %62, %c0_i32_26 : i32
    scf.if %63 {
      %c0_27 = arith.constant 0 : index
      %c0_28 = arith.constant 0 : index
      %64 = vector.load %arg15[%c0_27, %c0_28] : memref<8x128xf32, #tpu.memory_space<vmem>>, vector<8x128xf32>
      %c0_29 = arith.constant 0 : index
      %c0_30 = arith.constant 0 : index
      %65 = vector.load %arg7[%c0_29, %c0_30] : memref<1x128xf32, #tpu.memory_space<vmem>>, vector<1x128xf32>
      %66 = vector.broadcast %65 : vector<1x128xf32> to vector<8x128xf32>
      %67 = arith.mulf %64, %66 : vector<8x128xf32>
      %c0_31 = arith.constant 0 : index
      %c0_32 = arith.constant 0 : index
      %68 = vector.load %arg11[%c0_31, %c0_32] : memref<32x1xf32, #tpu.memory_space<vmem>>, vector<32x1xf32>
      %c0_33 = arith.constant 0 : index
      %c0_34 = arith.constant 0 : index
      %69 = vector.load %arg5[%c0_33, %c0_34] : memref<1x128xf32, #tpu.memory_space<vmem>>, vector<1x128xf32>
      %70 = vector.broadcast %68 : vector<32x1xf32> to vector<32x128xf32>
      %71 = vector.broadcast %69 : vector<1x128xf32> to vector<32x128xf32>
      %72 = arith.mulf %70, %71 : vector<32x128xf32>
      %c0_35 = arith.constant 0 : index
      %c0_36 = arith.constant 0 : index
      %73 = vector.load %arg12[%c0_35, %c0_36] : memref<32x1xf32, #tpu.memory_space<vmem>>, vector<32x1xf32>
      %74 = vector.broadcast %73 : vector<32x1xf32> to vector<32x128xf32>
      %75 = arith.addf %72, %74 : vector<32x128xf32>
      %cst_37 = arith.constant 0.000000e+00 : f32
      %76 = vector.broadcast %cst_37 : f32 to vector<32x128xf32>
      %77 = arith.cmpf oge, %75, %76 : vector<32x128xf32>
      %cst_38 = arith.constant 2.000000e-01 : f32
      %78 = vector.broadcast %cst_38 : f32 to vector<32x128xf32>
      %79 = arith.mulf %78, %75 : vector<32x128xf32>
      %80 = arith.select %77, %75, %79 : vector<32x128xi1>, vector<32x128xf32>
      %c0_39 = arith.constant 0 : index
      %c0_40 = arith.constant 0 : index
      %81 = vector.load %arg13[%c0_39, %c0_40] : memref<32x1xf32, #tpu.memory_space<vmem>>, vector<32x1xf32>
      %82 = vector.broadcast %81 : vector<32x1xf32> to vector<32x128xf32>
      %83 = arith.mulf %82, %80 : vector<32x128xf32>
      %cst_41 = arith.constant dense<0.000000e+00> : vector<128xf32>
      %84 = vector.multi_reduction <add>, %83, %cst_41 [0] : vector<32x128xf32> to vector<128xf32>
      %85 = vector.shape_cast %84 : vector<128xf32> to vector<1x128xf32>
      %c0_42 = arith.constant 0 : index
      %c0_43 = arith.constant 0 : index
      %86 = vector.load %arg14[%c0_42, %c0_43] : memref<1x1xf32, #tpu.memory_space<vmem>>, vector<1x1xf32>
      %87 = vector.broadcast %86 : vector<1x1xf32> to vector<1x128xf32>
      %88 = arith.addf %85, %87 : vector<1x128xf32>
      %cst_44 = arith.constant 1.000000e+00 : f32
      %89 = vector.broadcast %cst_44 : f32 to vector<8x128xf32>
      %90 = arith.mulf %67, %89 : vector<8x128xf32>
      %91 = arith.addf %3, %90 : vector<8x128xf32>
      %c0_45 = arith.constant 0 : index
      %c0_46 = arith.constant 0 : index
      %92 = vector.load %arg6[%c0_45, %c0_46] : memref<8x128xf32, #tpu.memory_space<vmem>>, vector<8x128xf32>
      %93 = vector.broadcast %88 : vector<1x128xf32> to vector<8x128xf32>
      %94 = arith.mulf %92, %93 : vector<8x128xf32>
      %95 = arith.addf %91, %94 : vector<8x128xf32>
      %c0_47 = arith.constant 0 : index
      %c0_48 = arith.constant 0 : index
      %96 = vector.load %arg15[%c0_47, %c0_48] : memref<8x128xf32, #tpu.memory_space<vmem>>, vector<8x128xf32>
      tpu.vector_store %arg15[%c0_47, %c0_48], %95 {strides = array<i32>} : memref<8x128xf32, #tpu.memory_space<vmem>>, vector<8x128xf32>,
    } else {
    }
    return
  }
  func.func @transform_0(%arg0: i32) -> (i32, i32) {
    %c0_i32 = arith.constant 0 : i32
    %c0_i32_0 = arith.constant 0 : i32
    return %c0_i32, %arg0 : i32, i32
  }
  func.func @transform_1(%arg0: i32) -> (i32, i32) {
    %c0_i32 = arith.constant 0 : i32
    %c0_i32_0 = arith.constant 0 : i32
    return %c0_i32, %arg0 : i32, i32
  }
  func.func @transform_2(%arg0: i32) -> (i32, i32) {
    %c0_i32 = arith.constant 0 : i32
    %c0_i32_0 = arith.constant 0 : i32
    return %c0_i32, %arg0 : i32, i32
  }
  func.func @transform_3(%arg0: i32) -> (i32, i32) {
    %c0_i32 = arith.constant 0 : i32
    %c0_i32_0 = arith.constant 0 : i32
    %c0_i32_1 = arith.constant 0 : i32
    return %c0_i32, %c0_i32_0 : i32, i32
  }
  func.func @transform_4(%arg0: i32) -> (i32, i32) {
    %c0_i32 = arith.constant 0 : i32
    %c0_i32_0 = arith.constant 0 : i32
    %c0_i32_1 = arith.constant 0 : i32
    return %c0_i32, %c0_i32_0 : i32, i32
  }
  func.func @transform_5(%arg0: i32) -> (i32, i32) {
    %c0_i32 = arith.constant 0 : i32
    %c0_i32_0 = arith.constant 0 : i32
    %c0_i32_1 = arith.constant 0 : i32
    return %c0_i32, %c0_i32_0 : i32, i32
  }
  func.func @transform_6(%arg0: i32) -> (i32, i32) {
    %c0_i32 = arith.constant 0 : i32
    %c0_i32_0 = arith.constant 0 : i32
    %c0_i32_1 = arith.constant 0 : i32
    return %c0_i32, %c0_i32_0 : i32, i32
  }
  func.func @transform_7(%arg0: i32) -> (i32, i32) {
    %c0_i32 = arith.constant 0 : i32
    %c0_i32_0 = arith.constant 0 : i32
    %c0_i32_1 = arith.constant 0 : i32
    return %c0_i32, %c0_i32_0 : i32, i32
  }
  func.func @transform_8(%arg0: i32) -> (i32, i32) {
    %c0_i32 = arith.constant 0 : i32
    %c0_i32_0 = arith.constant 0 : i32
    %c0_i32_1 = arith.constant 0 : i32
    return %c0_i32, %c0_i32_0 : i32, i32
  }
  func.func @transform_9(%arg0: i32) -> (i32, i32) {
    %c0_i32 = arith.constant 0 : i32
    %c0_i32_0 = arith.constant 0 : i32
    %c0_i32_1 = arith.constant 0 : i32
    return %c0_i32, %c0_i32_0 : i32, i32
  }
  func.func @transform_10(%arg0: i32) -> (i32, i32) {
    %c0_i32 = arith.constant 0 : i32
    %c0_i32_0 = arith.constant 0 : i32
    %c0_i32_1 = arith.constant 0 : i32
    return %c0_i32, %c0_i32_0 : i32, i32
  }
  func.func @transform_11(%arg0: i32) -> (i32, i32) {
    %c0_i32 = arith.constant 0 : i32
    %c0_i32_0 = arith.constant 0 : i32
    %c0_i32_1 = arith.constant 0 : i32
    return %c0_i32, %c0_i32_0 : i32, i32
  }
  func.func @transform_12(%arg0: i32) -> (i32, i32) {
    %c0_i32 = arith.constant 0 : i32
    %c0_i32_0 = arith.constant 0 : i32
    %c0_i32_1 = arith.constant 0 : i32
    return %c0_i32, %c0_i32_0 : i32, i32
  }
  func.func @transform_13(%arg0: i32) -> (i32, i32) {
    %c0_i32 = arith.constant 0 : i32
    %c0_i32_0 = arith.constant 0 : i32
    %c0_i32_1 = arith.constant 0 : i32
    return %c0_i32, %c0_i32_0 : i32, i32
  }
  func.func @transform_14(%arg0: i32) -> (i32, i32) {
    %c0_i32 = arith.constant 0 : i32
    %c0_i32_0 = arith.constant 0 : i32
    %c0_i32_1 = arith.constant 0 : i32
    return %c0_i32, %c0_i32_0 : i32, i32
  }
}

</mosaic_0001>

<llo_original>
// kernel: tpu_custom_call.1
$region0: #{tpu_custom_call.1}
  #allocation0 [shape = 'u32[]', space=smem, size = 0x4, offset = 0x4, fixed_abs, tag = 'smem constant byte address 0x4 - core index']
  #allocation1 [shape = 'u32[72,128]{1,0:T(1,128)}', space=vmem, size = 0x9000, scoped, tag = 'internal scratch']
  #allocation2 [shape = 's32[128,128]{1,0:T(8,128)}', space=vmem, size = 0x10000, scoped, tag = 'scratch operand']
  #allocation3 [shape = 'f32[1,1]{1,0:T(1,128)S(1)}', space=vmem, size = 0x200, scoped, tag = 'scoped memory for tpu_custom_call.1']
  %s0 = inlined_call_operand.vmem [shape: s32[1,256], index: 0, kind: input, shape index: {}]
  %s1 = inlined_call_operand.vmem [shape: s32[1,256], index: 1, kind: input, shape index: {}]
  %s2 = inlined_call_operand.vmem [shape: f32[2,256], index: 2, kind: input, shape index: {}]
  %s3 = inlined_call_operand.vmem [shape: f32[8,128], index: 3, kind: input, shape index: {}]
  %s4 = inlined_call_operand.vmem [shape: f32[1,128], index: 4, kind: input, shape index: {}]
  %s5 = inlined_call_operand.vmem [shape: f32[8,128], index: 5, kind: input, shape index: {}]
  %s6 = inlined_call_operand.vmem [shape: f32[1,128], index: 6, kind: input, shape index: {}]
  %s7 = inlined_call_operand.vmem [shape: f32[32,3], index: 7, kind: input, shape index: {}]
  %s8 = inlined_call_operand.vmem [shape: f32[32,1], index: 8, kind: input, shape index: {}]
  %s9 = inlined_call_operand.vmem [shape: f32[32,1], index: 9, kind: input, shape index: {}]
  %s10 = inlined_call_operand.vmem [shape: f32[32,1], index: 10, kind: input, shape index: {}]
  %s11 = inlined_call_operand.vmem [shape: f32[32,1], index: 11, kind: input, shape index: {}]
  %s12 = inlined_call_operand.vmem [shape: f32[32,1], index: 12, kind: input, shape index: {}]
  %s13 = inlined_call_operand.<no memory space> [shape: f32[1,1], index: 13, kind: input, shape index: {}]
  %s14 = inlined_call_operand.hbm [shape: f32[8,128], index: 14, kind: output, shape index: {}]
  %s15 = sld [smem:[#allocation0]]
  $region105: #{tpu_custom_call.1} parent=0
    _
  %s17 = ssub.s32 1, %s15
  %s18 = scalar_select 0, %s17, %s15
  %v19 = vstv %s13
  %20 = vst [vmem:[#allocation3] sm:$0x1] %v19
  $region1: #{tpu_custom_call.1} parent=0
    #allocation4 [shape = 'u8[4096]{0}', space=vmem, size = 0x1000, scoped, tag = 'output window, operand 0, single buffered']
    #allocation5 [shape = 's32[2]{0}', space=sflag, size = 0x8, scoped, tag = 'scoped memory for tpu_custom_call.1']
    %21 = vsyncpa [#allocation5], 0
    loop: start=0, step=1, limit=4
    $region2: #{tpu_custom_call.1} parent=1 // loop_pre_header
      _
    $region3: #{tpu_custom_call.1} parent=1 // loop_header
      %s23 = sphi 0, %s27
      %p24 = scmp.ge.s32.totalorder %s23, 4
      %s33 = sphi 0, %s35
      %s36 = sphi 0, %s33
      %s37 = sphi 0, %s36
      %s53 = sphi 0, %s37
      %s59 = sphi 0, %s61
      %s62 = sphi 0, %s59
      %s63 = sphi 0, %s62
      %s79 = sphi 0, %s63
      %s85 = sphi 0, %s87
      %s88 = sphi 0, %s85
      %s89 = sphi 0, %s88
      %s105 = sphi 0, %s89
      %s109 = sphi 0, %s109
      %s111 = sphi 0, %s109
      %s112 = sphi 0, %s111
      %s126 = sphi 0, %s112
      %s130 = sphi 0, %s130
      %s132 = sphi 0, %s130
      %s133 = sphi 0, %s132
      %s147 = sphi 0, %s133
      %s151 = sphi 0, %s151
      %s153 = sphi 0, %s151
      %s154 = sphi 0, %s153
      %s168 = sphi 0, %s154
      %s172 = sphi 0, %s172
      %s174 = sphi 0, %s172
      %s175 = sphi 0, %s174
      %s189 = sphi 0, %s175
      %s193 = sphi 0, %s193
      %s195 = sphi 0, %s193
      %s196 = sphi 0, %s195
      %s210 = sphi 0, %s196
      %s214 = sphi 0, %s214
      %s216 = sphi 0, %s214
      %s217 = sphi 0, %s216
      %s231 = sphi 0, %s217
      %s235 = sphi 0, %s235
      %s237 = sphi 0, %s235
      %s238 = sphi 0, %s237
      %s252 = sphi 0, %s238
      %s256 = sphi 0, %s256
      %s258 = sphi 0, %s256
      %s259 = sphi 0, %s258
      %s273 = sphi 0, %s259
      %s277 = sphi 0, %s277
      %s279 = sphi 0, %s277
      %s280 = sphi 0, %s279
      %s294 = sphi 0, %s280
      %s298 = sphi 0, %s298
      %s300 = sphi 0, %s298
      %s301 = sphi 0, %s300
      %s315 = sphi 0, %s301
      %s319 = sphi 0, %s319
      %s321 = sphi 0, %s319
      %s322 = sphi 0, %s321
      %s336 = sphi 0, %s322
      %s340 = sphi 0, %s340
      %s342 = sphi 0, %s340
      %s343 = sphi 0, %s342
      %s357 = sphi 0, %s343
    $region4: #{tpu_custom_call.1} parent=1 // loop_header_branch
      %26 = sbr.rel (%p24) target = $region8
    $region5: #{tpu_custom_call.1} parent=1 // loop_body
      %s28 = ssub.s32 %s23, 1
      %s29 = ssub.s32 %s23, 2
      %s30 = sadd.s32 %s23, 1
      %s31 = ssub.s32 %s23, %s30
      %p32 = scmp.eq.s32.totalorder %s31, 0
      %s34 = sadd.s32 %s33, 1
      %s35 = scalar_select %p32, %s33, %s34
      %p38 = pneg %p32
      %p39 = scmp.eq.s32.totalorder %s23, 1
      %p40 = por %p38, %p39
      %p41 = scmp.ne.s32.totalorder %s33, %s36
      %p42 = scmp.eq.s32.totalorder %s23, 0
      %p43 = por %p41, %p42
      %p44 = scmp.ne.s32.totalorder %s33, %s36
      %p45 = scmp.eq.s32.totalorder %s28, 1
      %p46 = por %p44, %p45
      %p47 = scmp.ne.s32.totalorder %s36, %s37
      %p48 = scmp.eq.s32.totalorder %s28, 0
      %p49 = por %p47, %p48
      %p50 = scmp.ne.s32.totalorder %s36, %s37
      %p51 = scmp.eq.s32.totalorder %s29, 1
      %p52 = por %p50, %p51
      %p54 = scmp.ne.s32.totalorder %s37, %s53
      %p55 = scmp.eq.s32.totalorder %s29, 0
      %p56 = por %p54, %p55
      %s57 = ssub.s32 %s23, %s30
      %p58 = scmp.eq.s32.totalorder %s57, 0
      %s60 = sadd.s32 %s59, 1
      %s61 = scalar_select %p58, %s59, %s60
      %p64 = pneg %p58
      %p65 = scmp.eq.s32.totalorder %s23, 1
      %p66 = por %p64, %p65
      %p67 = scmp.ne.s32.totalorder %s59, %s62
      %p68 = scmp.eq.s32.totalorder %s23, 0
      %p69 = por %p67, %p68
      %p70 = scmp.ne.s32.totalorder %s59, %s62
      %p71 = scmp.eq.s32.totalorder %s28, 1
      %p72 = por %p70, %p71
      %p73 = scmp.ne.s32.totalorder %s62, %s63
      %p74 = scmp.eq.s32.totalorder %s28, 0
      %p75 = por %p73, %p74
      %p76 = scmp.ne.s32.totalorder %s62, %s63
      %p77 = scmp.eq.s32.totalorder %s29, 1
      %p78 = por %p76, %p77
      %p80 = scmp.ne.s32.totalorder %s63, %s79
      %p81 = scmp.eq.s32.totalorder %s29, 0
      %p82 = por %p80, %p81
      %s83 = ssub.s32 %s23, %s30
      %p84 = scmp.eq.s32.totalorder %s83, 0
      %s86 = sadd.s32 %s85, 1
      %s87 = scalar_select %p84, %s85, %s86
      %p90 = pneg %p84
      %p91 = scmp.eq.s32.totalorder %s23, 1
      %p92 = por %p90, %p91
      %p93 = scmp.ne.s32.totalorder %s85, %s88
      %p94 = scmp.eq.s32.totalorder %s23, 0
      %p95 = por %p93, %p94
      %p96 = scmp.ne.s32.totalorder %s85, %s88
      %p97 = scmp.eq.s32.totalorder %s28, 1
      %p98 = por %p96, %p97
      %p99 = scmp.ne.s32.totalorder %s88, %s89
      %p100 = scmp.eq.s32.totalorder %s28, 0
      %p101 = por %p99, %p100
      %p102 = scmp.ne.s32.totalorder %s88, %s89
      %p103 = scmp.eq.s32.totalorder %s29, 1
      %p104 = por %p102, %p103
      %p106 = scmp.ne.s32.totalorder %s89, %s105
      %p107 = scmp.eq.s32.totalorder %s29, 0
      %p108 = por %p106, %p107
      %s110 = sadd.s32 %s109, 1
      %p113 = scmp.eq.s32.totalorder %s23, 1
      %p114 = scmp.ne.s32.totalorder %s109, %s111
      %p115 = scmp.eq.s32.totalorder %s23, 0
      %p116 = por %p114, %p115
      %p117 = scmp.ne.s32.totalorder %s109, %s111
      %p118 = scmp.eq.s32.totalorder %s28, 1
      %p119 = por %p117, %p118
      %p120 = scmp.ne.s32.totalorder %s111, %s112
      %p121 = scmp.eq.s32.totalorder %s28, 0
      %p122 = por %p120, %p121
      %p123 = scmp.ne.s32.totalorder %s111, %s112
      %p124 = scmp.eq.s32.totalorder %s29, 1
      %p125 = por %p123, %p124
      %p127 = scmp.ne.s32.totalorder %s112, %s126
      %p128 = scmp.eq.s32.totalorder %s29, 0
      %p129 = por %p127, %p128
      %s131 = sadd.s32 %s130, 1
      %p134 = scmp.eq.s32.totalorder %s23, 1
      %p135 = scmp.ne.s32.totalorder %s130, %s132
      %p136 = scmp.eq.s32.totalorder %s23, 0
      %p137 = por %p135, %p136
      %p138 = scmp.ne.s32.totalorder %s130, %s132
      %p139 = scmp.eq.s32.totalorder %s28, 1
      %p140 = por %p138, %p139
      %p141 = scmp.ne.s32.totalorder %s132, %s133
      %p142 = scmp.eq.s32.totalorder %s28, 0
      %p143 = por %p141, %p142
      %p144 = scmp.ne.s32.totalorder %s132, %s133
      %p145 = scmp.eq.s32.totalorder %s29, 1
      %p146 = por %p144, %p145
      %p148 = scmp.ne.s32.totalorder %s133, %s147
      %p149 = scmp.eq.s32.totalorder %s29, 0
      %p150 = por %p148, %p149
      %s152 = sadd.s32 %s151, 1
      %p155 = scmp.eq.s32.totalorder %s23, 1
      %p156 = scmp.ne.s32.totalorder %s151, %s153
      %p157 = scmp.eq.s32.totalorder %s23, 0
      %p158 = por %p156, %p157
      %p159 = scmp.ne.s32.totalorder %s151, %s153
      %p160 = scmp.eq.s32.totalorder %s28, 1
      %p161 = por %p159, %p160
      %p162 = scmp.ne.s32.totalorder %s153, %s154
      %p163 = scmp.eq.s32.totalorder %s28, 0
      %p164 = por %p162, %p163
      %p165 = scmp.ne.s32.totalorder %s153, %s154
      %p166 = scmp.eq.s32.totalorder %s29, 1
      %p167 = por %p165, %p166
      %p169 = scmp.ne.s32.totalorder %s154, %s168
      %p170 = scmp.eq.s32.totalorder %s29, 0
      %p171 = por %p169, %p170
      %s173 = sadd.s32 %s172, 1
      %p176 = scmp.eq.s32.totalorder %s23, 1
      %p177 = scmp.ne.s32.totalorder %s172, %s174
      %p178 = scmp.eq.s32.totalorder %s23, 0
      %p179 = por %p177, %p178
      %p180 = scmp.ne.s32.totalorder %s172, %s174
      %p181 = scmp.eq.s32.totalorder %s28, 1
      %p182 = por %p180, %p181
      %p183 = scmp.ne.s32.totalorder %s174, %s175
      %p184 = scmp.eq.s32.totalorder %s28, 0
      %p185 = por %p183, %p184
      %p186 = scmp.ne.s32.totalorder %s174, %s175
      %p187 = scmp.eq.s32.totalorder %s29, 1
      %p188 = por %p186, %p187
      %p190 = scmp.ne.s32.totalorder %s175, %s189
      %p191 = scmp.eq.s32.totalorder %s29, 0
      %p192 = por %p190, %p191
      %s194 = sadd.s32 %s193, 1
      %p197 = scmp.eq.s32.totalorder %s23, 1
      %p198 = scmp.ne.s32.totalorder %s193, %s195
      %p199 = scmp.eq.s32.totalorder %s23, 0
      %p200 = por %p198, %p199
      %p201 = scmp.ne.s32.totalorder %s193, %s195
      %p202 = scmp.eq.s32.totalorder %s28, 1
      %p203 = por %p201, %p202
      %p204 = scmp.ne.s32.totalorder %s195, %s196
      %p205 = scmp.eq.s32.totalorder %s28, 0
      %p206 = por %p204, %p205
      %p207 = scmp.ne.s32.totalorder %s195, %s196
      %p208 = scmp.eq.s32.totalorder %s29, 1
      %p209 = por %p207, %p208
      %p211 = scmp.ne.s32.totalorder %s196, %s210
      %p212 = scmp.eq.s32.totalorder %s29, 0
      %p213 = por %p211, %p212
      %s215 = sadd.s32 %s214, 1
      %p218 = scmp.eq.s32.totalorder %s23, 1
      %p219 = scmp.ne.s32.totalorder %s214, %s216
      %p220 = scmp.eq.s32.totalorder %s23, 0
      %p221 = por %p219, %p220
      %p222 = scmp.ne.s32.totalorder %s214, %s216
      %p223 = scmp.eq.s32.totalorder %s28, 1
      %p224 = por %p222, %p223
      %p225 = scmp.ne.s32.totalorder %s216, %s217
      %p226 = scmp.eq.s32.totalorder %s28, 0
      %p227 = por %p225, %p226
      %p228 = scmp.ne.s32.totalorder %s216, %s217
      %p229 = scmp.eq.s32.totalorder %s29, 1
      %p230 = por %p228, %p229
      %p232 = scmp.ne.s32.totalorder %s217, %s231
      %p233 = scmp.eq.s32.totalorder %s29, 0
      %p234 = por %p232, %p233
      %s236 = sadd.s32 %s235, 1
      %p239 = scmp.eq.s32.totalorder %s23, 1
      %p240 = scmp.ne.s32.totalorder %s235, %s237
      %p241 = scmp.eq.s32.totalorder %s23, 0
      %p242 = por %p240, %p241
      %p243 = scmp.ne.s32.totalorder %s235, %s237
      %p244 = scmp.eq.s32.totalorder %s28, 1
      %p245 = por %p243, %p244
      %p246 = scmp.ne.s32.totalorder %s237, %s238
      %p247 = scmp.eq.s32.totalorder %s28, 0
      %p248 = por %p246, %p247
      %p249 = scmp.ne.s32.totalorder %s237, %s238
      %p250 = scmp.eq.s32.totalorder %s29, 1
      %p251 = por %p249, %p250
      %p253 = scmp.ne.s32.totalorder %s238, %s252
      %p254 = scmp.eq.s32.totalorder %s29, 0
      %p255 = por %p253, %p254
      %s257 = sadd.s32 %s256, 1
      %p260 = scmp.eq.s32.totalorder %s23, 1
      %p261 = scmp.ne.s32.totalorder %s256, %s258
      %p262 = scmp.eq.s32.totalorder %s23, 0
      %p263 = por %p261, %p262
      %p264 = scmp.ne.s32.totalorder %s256, %s258
      %p265 = scmp.eq.s32.totalorder %s28, 1
      %p266 = por %p264, %p265
      %p267 = scmp.ne.s32.totalorder %s258, %s259
      %p268 = scmp.eq.s32.totalorder %s28, 0
      %p269 = por %p267, %p268
      %p270 = scmp.ne.s32.totalorder %s258, %s259
      %p271 = scmp.eq.s32.totalorder %s29, 1
      %p272 = por %p270, %p271
      %p274 = scmp.ne.s32.totalorder %s259, %s273
      %p275 = scmp.eq.s32.totalorder %s29, 0
      %p276 = por %p274, %p275
      %s278 = sadd.s32 %s277, 1
      %p281 = scmp.eq.s32.totalorder %s23, 1
      %p282 = scmp.ne.s32.totalorder %s277, %s279
      %p283 = scmp.eq.s32.totalorder %s23, 0
      %p284 = por %p282, %p283
      %p285 = scmp.ne.s32.totalorder %s277, %s279
      %p286 = scmp.eq.s32.totalorder %s28, 1
      %p287 = por %p285, %p286
      %p288 = scmp.ne.s32.totalorder %s279, %s280
      %p289 = scmp.eq.s32.totalorder %s28, 0
      %p290 = por %p288, %p289
      %p291 = scmp.ne.s32.totalorder %s279, %s280
      %p292 = scmp.eq.s32.totalorder %s29, 1
      %p293 = por %p291, %p292
      %p295 = scmp.ne.s32.totalorder %s280, %s294
      %p296 = scmp.eq.s32.totalorder %s29, 0
      %p297 = por %p295, %p296
      %s299 = sadd.s32 %s298, 1
      %p302 = scmp.eq.s32.totalorder %s23, 1
      %p303 = scmp.ne.s32.totalorder %s298, %s300
      %p304 = scmp.eq.s32.totalorder %s23, 0
      %p305 = por %p303, %p304
      %p306 = scmp.ne.s32.totalorder %s298, %s300
      %p307 = scmp.eq.s32.totalorder %s28, 1
      %p308 = por %p306, %p307
      %p309 = scmp.ne.s32.totalorder %s300, %s301
      %p310 = scmp.eq.s32.totalorder %s28, 0
      %p311 = por %p309, %p310
      %p312 = scmp.ne.s32.totalorder %s300, %s301
      %p313 = scmp.eq.s32.totalorder %s29, 1
      %p314 = por %p312, %p313
      %p316 = scmp.ne.s32.totalorder %s301, %s315
      %p317 = scmp.eq.s32.totalorder %s29, 0
      %p318 = por %p316, %p317
      %s320 = sadd.s32 %s319, 1
      %p323 = scmp.eq.s32.totalorder %s23, 1
      %p324 = scmp.ne.s32.totalorder %s319, %s321
      %p325 = scmp.eq.s32.totalorder %s23, 0
      %p326 = por %p324, %p325
      %p327 = scmp.ne.s32.totalorder %s319, %s321
      %p328 = scmp.eq.s32.totalorder %s28, 1
      %p329 = por %p327, %p328
      %p330 = scmp.ne.s32.totalorder %s321, %s322
      %p331 = scmp.eq.s32.totalorder %s28, 0
      %p332 = por %p330, %p331
      %p333 = scmp.ne.s32.totalorder %s321, %s322
      %p334 = scmp.eq.s32.totalorder %s29, 1
      %p335 = por %p333, %p334
      %p337 = scmp.ne.s32.totalorder %s322, %s336
      %p338 = scmp.eq.s32.totalorder %s29, 0
      %p339 = por %p337, %p338
      %s341 = sadd.s32 %s340, 1
      %p344 = scmp.eq.s32.totalorder %s23, 1
      %p345 = scmp.ne.s32.totalorder %s340, %s342
      %p346 = scmp.eq.s32.totalorder %s23, 0
      %p347 = por %p345, %p346
      %p348 = scmp.ne.s32.totalorder %s340, %s342
      %p349 = scmp.eq.s32.totalorder %s28, 1
      %p350 = por %p348, %p349
      %p351 = scmp.ne.s32.totalorder %s342, %s343
      %p352 = scmp.eq.s32.totalorder %s28, 0
      %p353 = por %p351, %p352
      %p354 = scmp.ne.s32.totalorder %s342, %s343
      %p355 = scmp.eq.s32.totalorder %s29, 1
      %p356 = por %p354, %p355
      %p358 = scmp.ne.s32.totalorder %s343, %s357
      %p359 = scmp.eq.s32.totalorder %s29, 0
      %p360 = por %p358, %p359
      %p361 = scmp.le.s32.totalorder 1, %s23
      %p362 = scmp.lt.s32.totalorder %s23, 3
      %p363 = pnand %p361, %p362
      %p364 = pneg %p363
      // Predicated region
      $region9: #{tpu_custom_call.1} parent=5 // pred_check
        _
      $region10: #{tpu_custom_call.1} parent=5 // pred_check_branch
        %366 = sbr.rel (%p363) target = $region12
      $region11: #{tpu_custom_call.1} parent=5 // pred_region
        %s367 = ssub.s32 %s23, 1
        // Predicated region
        $region13: #{tpu_custom_call.1} parent=11 // pred_check
          %p368 = pneg %p122
        $region14: #{tpu_custom_call.1} parent=11 // pred_check_branch
          %370 = sbr.rel (%p368) target = $region16
        $region15: #{tpu_custom_call.1} parent=11 // pred_region
          _
        $region16: #{tpu_custom_call.1} parent=11 // pred_fallthru
          _
        // Predicated region
        $region17: #{tpu_custom_call.1} parent=11 // pred_check
          %p371 = pneg %p143
        $region18: #{tpu_custom_call.1} parent=11 // pred_check_branch
          %373 = sbr.rel (%p371) target = $region20
        $region19: #{tpu_custom_call.1} parent=11 // pred_region
          _
        $region20: #{tpu_custom_call.1} parent=11 // pred_fallthru
          _
        // Predicated region
        $region21: #{tpu_custom_call.1} parent=11 // pred_check
          %p374 = pneg %p164
        $region22: #{tpu_custom_call.1} parent=11 // pred_check_branch
          %376 = sbr.rel (%p374) target = $region24
        $region23: #{tpu_custom_call.1} parent=11 // pred_region
          _
        $region24: #{tpu_custom_call.1} parent=11 // pred_fallthru
          _
        // Predicated region
        $region25: #{tpu_custom_call.1} parent=11 // pred_check
          %p377 = pneg %p185
        $region26: #{tpu_custom_call.1} parent=11 // pred_check_branch
          %379 = sbr.rel (%p377) target = $region28
        $region27: #{tpu_custom_call.1} parent=11 // pred_region
          _
        $region28: #{tpu_custom_call.1} parent=11 // pred_fallthru
          _
        // Predicated region
        $region29: #{tpu_custom_call.1} parent=11 // pred_check
          %p380 = pneg %p206
        $region30: #{tpu_custom_call.1} parent=11 // pred_check_branch
          %382 = sbr.rel (%p380) target = $region32
        $region31: #{tpu_custom_call.1} parent=11 // pred_region
          _
        $region32: #{tpu_custom_call.1} parent=11 // pred_fallthru
          _
        // Predicated region
        $region33: #{tpu_custom_call.1} parent=11 // pred_check
          %p383 = pneg %p227
        $region34: #{tpu_custom_call.1} parent=11 // pred_check_branch
          %385 = sbr.rel (%p383) target = $region36
        $region35: #{tpu_custom_call.1} parent=11 // pred_region
          _
        $region36: #{tpu_custom_call.1} parent=11 // pred_fallthru
          _
        // Predicated region
        $region37: #{tpu_custom_call.1} parent=11 // pred_check
          %p386 = pneg %p248
        $region38: #{tpu_custom_call.1} parent=11 // pred_check_branch
          %388 = sbr.rel (%p386) target = $region40
        $region39: #{tpu_custom_call.1} parent=11 // pred_region
          _
        $region40: #{tpu_custom_call.1} parent=11 // pred_fallthru
          _
        // Predicated region
        $region41: #{tpu_custom_call.1} parent=11 // pred_check
          %p389 = pneg %p269
        $region42: #{tpu_custom_call.1} parent=11 // pred_check_branch
          %391 = sbr.rel (%p389) target = $region44
        $region43: #{tpu_custom_call.1} parent=11 // pred_region
          _
        $region44: #{tpu_custom_call.1} parent=11 // pred_fallthru
          _
        // Predicated region
        $region45: #{tpu_custom_call.1} parent=11 // pred_check
          %p392 = pneg %p290
        $region46: #{tpu_custom_call.1} parent=11 // pred_check_branch
          %394 = sbr.rel (%p392) target = $region48
        $region47: #{tpu_custom_call.1} parent=11 // pred_region
          _
        $region48: #{tpu_custom_call.1} parent=11 // pred_fallthru
          _
        // Predicated region
        $region49: #{tpu_custom_call.1} parent=11 // pred_check
          %p395 = pneg %p311
        $region50: #{tpu_custom_call.1} parent=11 // pred_check_branch
          %397 = sbr.rel (%p395) target = $region52
        $region51: #{tpu_custom_call.1} parent=11 // pred_region
          _
        $region52: #{tpu_custom_call.1} parent=11 // pred_fallthru
          _
        // Predicated region
        $region53: #{tpu_custom_call.1} parent=11 // pred_check
          %p398 = pneg %p332
        $region54: #{tpu_custom_call.1} parent=11 // pred_check_branch
          %400 = sbr.rel (%p398) target = $region56
        $region55: #{tpu_custom_call.1} parent=11 // pred_region
          _
        $region56: #{tpu_custom_call.1} parent=11 // pred_fallthru
          _
      $region12: #{tpu_custom_call.1} parent=5 // pred_fallthru
        _
      %p401 = scmp.lt.s32.totalorder %s23, 2
      // Predicated region
      $region57: #{tpu_custom_call.1} parent=5 // pred_check
        %p402 = pneg %p401
      $region58: #{tpu_custom_call.1} parent=5 // pred_check_branch
        %404 = sbr.rel (%p402) target = $region60
      $region59: #{tpu_custom_call.1} parent=5 // pred_region
        // Predicated region
        $region61: #{tpu_custom_call.1} parent=59 // pred_check
          %p405 = pneg %p43
        $region62: #{tpu_custom_call.1} parent=59 // pred_check_branch
          %407 = sbr.rel (%p405) target = $region64
        $region63: #{tpu_custom_call.1} parent=59 // pred_region
          %p408 = scmp.lt.s32.totalorder %s23, 1
          %s409 = scalar_select %p408, %s23, 1
          %s410 = scalar_lea.vmem %s0, %s409
        $region64: #{tpu_custom_call.1} parent=59 // pred_fallthru
          _
        // Predicated region
        $region65: #{tpu_custom_call.1} parent=59 // pred_check
          %p411 = pneg %p69
        $region66: #{tpu_custom_call.1} parent=59 // pred_check_branch
          %413 = sbr.rel (%p411) target = $region68
        $region67: #{tpu_custom_call.1} parent=59 // pred_region
          %p414 = scmp.lt.s32.totalorder %s23, 1
          %s415 = scalar_select %p414, %s23, 1
          %s416 = scalar_lea.vmem %s1, %s415
        $region68: #{tpu_custom_call.1} parent=59 // pred_fallthru
          _
        // Predicated region
        $region69: #{tpu_custom_call.1} parent=59 // pred_check
          %p417 = pneg %p95
        $region70: #{tpu_custom_call.1} parent=59 // pred_check_branch
          %419 = sbr.rel (%p417) target = $region72
        $region71: #{tpu_custom_call.1} parent=59 // pred_region
          %p420 = scmp.lt.s32.totalorder %s23, 1
          %s421 = scalar_select %p420, %s23, 1
          %s422 = smul.addr %s421, 2
          %s423 = scalar_lea.vmem %s2, %s422
        $region72: #{tpu_custom_call.1} parent=59 // pred_fallthru
          _
      $region60: #{tpu_custom_call.1} parent=5 // pred_fallthru
        _
      %p424 = scmp.le.s32.totalorder 1, %s23
      %p425 = scmp.lt.s32.totalorder %s23, 3
      %p426 = pnand %p424, %p425
      %p427 = pneg %p426
      // Predicated region
      $region73: #{tpu_custom_call.1} parent=5 // pred_check
        _
      $region74: #{tpu_custom_call.1} parent=5 // pred_check_branch
        %429 = sbr.rel (%p426) target = $region76
      $region75: #{tpu_custom_call.1} parent=5 // pred_region
        %s430 = ssub.s32 %s23, 1
        %p431 = scmp.lt.s32.totalorder %s28, 1
        %s432 = scalar_select %p431, %s28, 1
        %s433 = scalar_lea.vmem %s0, %s432
        %p434 = pneg %p49
        %p435 = pneg %p46
        %p436 = scmp.lt.s32.totalorder %s28, 1
        %s437 = scalar_select %p436, %s28, 1
        %s438 = scalar_lea.vmem %s1, %s437
        %p439 = pneg %p75
        %p440 = pneg %p72
        %p441 = scmp.lt.s32.totalorder %s28, 1
        %s442 = scalar_select %p441, %s28, 1
        %s443 = smul.addr %s442, 2
        %s444 = scalar_lea.vmem %s2, %s443
        %p445 = pneg %p101
        %p446 = pneg %p98
        %p447 = pneg %p122
        %p448 = pneg %p119
        %p449 = pneg %p143
        %p450 = pneg %p140
        %p451 = pneg %p164
        %p452 = pneg %p161
        %p453 = pneg %p185
        %p454 = pneg %p182
        %p455 = pneg %p206
        %p456 = pneg %p203
        %p457 = pneg %p227
        %p458 = pneg %p224
        %p459 = pneg %p248
        %p460 = pneg %p245
        %p461 = pneg %p269
        %p462 = pneg %p266
        %p463 = pneg %p290
        %p464 = pneg %p287
        %p465 = pneg %p311
        %p466 = pneg %p308
        %p467 = pneg %p332
        %p468 = pneg %p329
        %p469 = pneg %p353
        %p470 = pneg %p350
        %p471 = scmp.lt.s32.totalorder %s28, 1
        %s472 = scalar_select %p471, %s28, 1
        %s473 = scalar_lea.vmem %s0, %s472
        %p474 = scmp.lt.s32.totalorder %s28, 1
        %s475 = scalar_select %p474, %s28, 1
        %s476 = scalar_lea.vmem %s1, %s475
        %p477 = scmp.lt.s32.totalorder %s28, 1
        %s478 = scalar_select %p477, %s28, 1
        %s479 = smul.addr %s478, 2
        %s480 = scalar_lea.vmem %s2, %s479
        %p481 = scmp.eq.s32.totalorder %s28, 0
        // Predicated region
        $region77: #{tpu_custom_call.1} parent=75 // pred_check
          %p482 = pneg %p481
        $region78: #{tpu_custom_call.1} parent=75 // pred_check_branch
          %484 = sbr.rel (%p482) target = $region80
        $region79: #{tpu_custom_call.1} parent=75 // pred_region
          %v485 = vlaneseq
          %v486 = vshrl.u32 %v485, 7
          %v487 = vadd.s32 %v486, 8
          %v488 = vadd.s32 %v486, 16
          %v489 = vadd.s32 %v486, 24
          %v490 = vadd.s32 %v486, 32
          %v491 = vadd.s32 %v486, 40
          %v492 = vadd.s32 %v486, 48
          %v493 = vadd.s32 %v486, 56
          %v494 = vadd.s32 %v486, 64
          %v495 = vadd.s32 %v486, 72
          %v496 = vadd.s32 %v486, 80
          %v497 = vadd.s32 %v486, 88
          %v498 = vadd.s32 %v486, 96
          %v499 = vadd.s32 %v486, 104
          %v500 = vadd.s32 %v486, 112
          %v501 = vadd.s32 %v486, 120
          %502 = vst [vmem:[#allocation2] sm:$0xff] %v486
          %503 = vst [vmem:[#allocation2 + $0x8] sm:$0xff] %v487
          %504 = vst [vmem:[#allocation2 + $0x10] sm:$0xff] %v488
          %505 = vst [vmem:[#allocation2 + $0x18] sm:$0xff] %v489
          %506 = vst [vmem:[#allocation2 + $0x20] sm:$0xff] %v490
          %507 = vst [vmem:[#allocation2 + $0x28] sm:$0xff] %v491
          %508 = vst [vmem:[#allocation2 + $0x30] sm:$0xff] %v492
          %509 = vst [vmem:[#allocation2 + $0x38] sm:$0xff] %v493
          %510 = vst [vmem:[#allocation2 + $0x40] sm:$0xff] %v494
          %511 = vst [vmem:[#allocation2 + $0x48] sm:$0xff] %v495
          %512 = vst [vmem:[#allocation2 + $0x50] sm:$0xff] %v496
          %513 = vst [vmem:[#allocation2 + $0x58] sm:$0xff] %v497
          %514 = vst [vmem:[#allocation2 + $0x60] sm:$0xff] %v498
          %515 = vst [vmem:[#allocation2 + $0x68] sm:$0xff] %v499
          %516 = vst [vmem:[#allocation2 + $0x70] sm:$0xff] %v500
          %517 = vst [vmem:[#allocation2 + $0x78] sm:$0xff] %v501
        $region80: #{tpu_custom_call.1} parent=75 // pred_fallthru
          _
        %v518 = vld [vmem:[%s3] sm:$0xff]
        %v519 = vld [vmem:[#allocation2] sm:$0xff]
        %v520 = vld [vmem:[#allocation2 + $0x8] sm:$0xff]
        %v521 = vld [vmem:[#allocation2 + $0x10] sm:$0xff]
        %v522 = vld [vmem:[#allocation2 + $0x18] sm:$0xff]
        %v523 = vld [vmem:[#allocation2 + $0x20] sm:$0xff]
        %v524 = vld [vmem:[#allocation2 + $0x28] sm:$0xff]
        %v525 = vld [vmem:[#allocation2 + $0x30] sm:$0xff]
        %v526 = vld [vmem:[#allocation2 + $0x38] sm:$0xff]
        %v527 = vld [vmem:[#allocation2 + $0x40] sm:$0xff]
        %v528 = vld [vmem:[#allocation2 + $0x48] sm:$0xff]
        %v529 = vld [vmem:[#allocation2 + $0x50] sm:$0xff]
        %v530 = vld [vmem:[#allocation2 + $0x58] sm:$0xff]
        %v531 = vld [vmem:[#allocation2 + $0x60] sm:$0xff]
        %v532 = vld [vmem:[#allocation2 + $0x68] sm:$0xff]
        %v533 = vld [vmem:[#allocation2 + $0x70] sm:$0xff]
        %v534 = vld [vmem:[#allocation2 + $0x78] sm:$0xff]
        %v535 = vld [vmem:[%s473] sm:$0x1]
        %v536 = vperm.slane %v535, 0
        %vm537 = vcmp.eq.s32.totalorder %v519, %v536
        %vm538 = vcmp.eq.s32.totalorder %v520, %v536
        %vm539 = vcmp.eq.s32.totalorder %v521, %v536
        %vm540 = vcmp.eq.s32.totalorder %v522, %v536
        %vm541 = vcmp.eq.s32.totalorder %v523, %v536
        %vm542 = vcmp.eq.s32.totalorder %v524, %v536
        %vm543 = vcmp.eq.s32.totalorder %v525, %v536
        %vm544 = vcmp.eq.s32.totalorder %v526, %v536
        %vm545 = vcmp.eq.s32.totalorder %v527, %v536
        %vm546 = vcmp.eq.s32.totalorder %v528, %v536
        %vm547 = vcmp.eq.s32.totalorder %v529, %v536
        %vm548 = vcmp.eq.s32.totalorder %v530, %v536
        %vm549 = vcmp.eq.s32.totalorder %v531, %v536
        %vm550 = vcmp.eq.s32.totalorder %v532, %v536
        %vm551 = vcmp.eq.s32.totalorder %v533, %v536
        %vm552 = vcmp.eq.s32.totalorder %v534, %v536
        %v553 = vsel %vm537, 1, 0
        %v554 = vsel %vm538, 1, 0
        %v555 = vsel %vm539, 1, 0
        %v556 = vsel %vm540, 1, 0
        %v557 = vsel %vm541, 1, 0
        %v558 = vsel %vm542, 1, 0
        %v559 = vsel %vm543, 1, 0
        %v560 = vsel %vm544, 1, 0
        %v561 = vsel %vm545, 1, 0
        %v562 = vsel %vm546, 1, 0
        %v563 = vsel %vm547, 1, 0
        %v564 = vsel %vm548, 1, 0
        %v565 = vsel %vm549, 1, 0
        %v566 = vsel %vm550, 1, 0
        %v567 = vsel %vm551, 1, 0
        %v568 = vsel %vm552, 1, 0
        %v569 = vcvt.s32.f32 %v553
        %v570 = vcvt.s32.f32 %v554
        %v571 = vcvt.s32.f32 %v555
        %v572 = vcvt.s32.f32 %v556
        %v573 = vcvt.s32.f32 %v557
        %v574 = vcvt.s32.f32 %v558
        %v575 = vcvt.s32.f32 %v559
        %v576 = vcvt.s32.f32 %v560
        %v577 = vcvt.s32.f32 %v561
        %v578 = vcvt.s32.f32 %v562
        %v579 = vcvt.s32.f32 %v563
        %v580 = vcvt.s32.f32 %v564
        %v581 = vcvt.s32.f32 %v565
        %v582 = vcvt.s32.f32 %v566
        %v583 = vcvt.s32.f32 %v567
        %v584 = vcvt.s32.f32 %v568
        %v585 = vld [vmem:[%s476] sm:$0x1]
        %v586 = vperm.slane %v585, 0
        %vm587 = vcmp.eq.s32.totalorder %v519, %v586
        %vm588 = vcmp.eq.s32.totalorder %v520, %v586
        %vm589 = vcmp.eq.s32.totalorder %v521, %v586
        %vm590 = vcmp.eq.s32.totalorder %v522, %v586
        %vm591 = vcmp.eq.s32.totalorder %v523, %v586
        %vm592 = vcmp.eq.s32.totalorder %v524, %v586
        %vm593 = vcmp.eq.s32.totalorder %v525, %v586
        %vm594 = vcmp.eq.s32.totalorder %v526, %v586
        %vm595 = vcmp.eq.s32.totalorder %v527, %v586
        %vm596 = vcmp.eq.s32.totalorder %v528, %v586
        %vm597 = vcmp.eq.s32.totalorder %v529, %v586
        %vm598 = vcmp.eq.s32.totalorder %v530, %v586
        %vm599 = vcmp.eq.s32.totalorder %v531, %v586
        %vm600 = vcmp.eq.s32.totalorder %v532, %v586
        %vm601 = vcmp.eq.s32.totalorder %v533, %v586
        %vm602 = vcmp.eq.s32.totalorder %v534, %v586
        %v603 = vsel %vm587, 1, 0
        %v604 = vsel %vm588, 1, 0
        %v605 = vsel %vm589, 1, 0
        %v606 = vsel %vm590, 1, 0
        %v607 = vsel %vm591, 1, 0
        %v608 = vsel %vm592, 1, 0
        %v609 = vsel %vm593, 1, 0
        %v610 = vsel %vm594, 1, 0
        %v611 = vsel %vm595, 1, 0
        %v612 = vsel %vm596, 1, 0
        %v613 = vsel %vm597, 1, 0
        %v614 = vsel %vm598, 1, 0
        %v615 = vsel %vm599, 1, 0
        %v616 = vsel %vm600, 1, 0
        %v617 = vsel %vm601, 1, 0
        %v618 = vsel %vm602, 1, 0
        %v619 = vcvt.s32.f32 %v603
        %v620 = vcvt.s32.f32 %v604
        %v621 = vcvt.s32.f32 %v605
        %v622 = vcvt.s32.f32 %v606
        %v623 = vcvt.s32.f32 %v607
        %v624 = vcvt.s32.f32 %v608
        %v625 = vcvt.s32.f32 %v609
        %v626 = vcvt.s32.f32 %v610
        %v627 = vcvt.s32.f32 %v611
        %v628 = vcvt.s32.f32 %v612
        %v629 = vcvt.s32.f32 %v613
        %v630 = vcvt.s32.f32 %v614
        %v631 = vcvt.s32.f32 %v615
        %v632 = vcvt.s32.f32 %v616
        %v633 = vcvt.s32.f32 %v617
        %v634 = vcvt.s32.f32 %v618
        %v635 = vsub.f32 %v569, %v619
        %v636 = vsub.f32 %v570, %v620
        %v637 = vsub.f32 %v571, %v621
        %v638 = vsub.f32 %v572, %v622
        %v639 = vsub.f32 %v573, %v623
        %v640 = vsub.f32 %v574, %v624
        %v641 = vsub.f32 %v575, %v625
        %v642 = vsub.f32 %v576, %v626
        %v643 = vsub.f32 %v577, %v627
        %v644 = vsub.f32 %v578, %v628
        %v645 = vsub.f32 %v579, %v629
        %v646 = vsub.f32 %v580, %v630
        %v647 = vsub.f32 %v581, %v631
        %v648 = vsub.f32 %v582, %v632
        %v649 = vsub.f32 %v583, %v633
        %v650 = vsub.f32 %v584, %v634
        %651 = vmatpush.msra.mxu0 %v650
        %652 = vmatpush.msra.mxu0 %v649
        %653 = vmatpush.msra.mxu0 %v648
        %654 = vmatpush.msra.mxu0 %v647
        %655 = vmatpush.msra.mxu0 %v646
        %656 = vmatpush.msra.mxu0 %v645
        %657 = vmatpush.msra.mxu0 %v644
        %658 = vmatpush.msra.mxu0 %v643
        %659 = vmatpush.msra.mxu0 %v642
        %660 = vmatpush.msra.mxu0 %v641
        %661 = vmatpush.msra.mxu0 %v640
        %662 = vmatpush.msra.mxu0 %v639
        %663 = vmatpush.msra.mxu0 %v638
        %664 = vmatpush.msra.mxu0 %v637
        %665 = vmatpush.msra.mxu0 %v636
        %666 = vmatpush.msra.mxu0 %v635
        %667 = vmatmul.f32.gmra.mxu0 %v518
        %v668 = vpop.f32.mrf.mxu0
        %v669 = vadd.f32 0.0, %v668
        %670 = vdwg.mxu0
        %v671 = vmul.f32 %v669, %v669
        %v672 = vrot.slane %v671, 4
        %v673 = vadd.f32 %v671, %v672
        %v674 = vrot.slane %v673, 2
        %v675 = vadd.f32 %v673, %v674
        %v676 = vrot.slane %v675, 1
        %v677 = vadd.f32 %v675, %v676
        %v678 = vrsqrt.pop %v677
        %v679 = vmul.f32 %v678, %v677
        %v680 = vmul.f32 %v679, %v678
        %v681 = vmul.f32 0.5, %v680
        %v682 = vsub.f32 1.5, %v681
        %v683 = vmul.f32 %v678, %v682
        %v684 = vmul.f32 %v677, %v683
        %vm685 = vcmp.eq.f32.partialorder %v677, inf
        %v686 = vsel %vm685, %v677, %v684
        %vm687 = vcmp.eq.f32.partialorder %v677, 0.0
        %v688 = vand.u32 %v677, 2147483648
        %v689 = vsel %vm687, %v688, %v686
        %v690 = vld [vmem:[%s7] sm:$0xff]
        %v691 = vld [vmem:[%s7 + $0x8] sm:$0xff]
        %v692 = vld [vmem:[%s7 + $0x10] sm:$0xff]
        %v693 = vld [vmem:[%s7 + $0x18] sm:$0xff]
        %695 = vset.pattern.permute.xlu0 0
        %696 = vperm.xlu0 %695, %v690
        %v697 = vpop.permute.xlu0 %696
        %700 = vset.pattern.permute.xlu0 0
        %701 = vperm.xlu0 %700, %v691
        %v702 = vpop.permute.xlu0 %701
        %705 = vset.pattern.permute.xlu0 0
        %706 = vperm.xlu0 %705, %v692
        %v707 = vpop.permute.xlu0 %706
        %710 = vset.pattern.permute.xlu0 0
        %711 = vperm.xlu0 %710, %v693
        %v712 = vpop.permute.xlu0 %711
        %v714 = vmul.f32 %v697, %v689
        %v715 = vmul.f32 %v702, %v689
        %v716 = vmul.f32 %v707, %v689
        %v717 = vmul.f32 %v712, %v689
        %v718 = vld [vmem:[%s8] sm:$0xff]
        %v719 = vld [vmem:[%s8 + $0x8] sm:$0xff]
        %v720 = vld [vmem:[%s8 + $0x10] sm:$0xff]
        %v721 = vld [vmem:[%s8 + $0x18] sm:$0xff]
        %723 = vset.pattern.permute.xlu0 0
        %724 = vperm.xlu0 %723, %v718
        %v725 = vpop.permute.xlu0 %724
        %728 = vset.pattern.permute.xlu0 0
        %729 = vperm.xlu0 %728, %v719
        %v730 = vpop.permute.xlu0 %729
        %733 = vset.pattern.permute.xlu0 0
        %734 = vperm.xlu0 %733, %v720
        %v735 = vpop.permute.xlu0 %734
        %738 = vset.pattern.permute.xlu0 0
        %739 = vperm.xlu0 %738, %v721
        %v740 = vpop.permute.xlu0 %739
        %v742 = vadd.f32 %v714, %v725
        %v743 = vadd.f32 %v715, %v730
        %v744 = vadd.f32 %v716, %v735
        %v745 = vadd.f32 %v717, %v740
        %v746 = vld [vmem:[%s480] sm:$0x1]
        %747 = vset.pattern.permute.xlu0 1
        %748 = vperm.xlu0 %747, %v690
        %v749 = vpop.permute.xlu0 %748
        %751 = vset.pattern.permute.xlu0 1
        %752 = vperm.xlu0 %751, %v691
        %v753 = vpop.permute.xlu0 %752
        %755 = vset.pattern.permute.xlu0 1
        %756 = vperm.xlu0 %755, %v692
        %v757 = vpop.permute.xlu0 %756
        %759 = vset.pattern.permute.xlu0 1
        %760 = vperm.xlu0 %759, %v693
        %v761 = vpop.permute.xlu0 %760
        %v763 = vperm.slane %v746, 0
        %v764 = vmul.f32 %v749, %v763
        %v765 = vmul.f32 %v753, %v763
        %v766 = vmul.f32 %v757, %v763
        %v767 = vmul.f32 %v761, %v763
        %v768 = vadd.f32 %v742, %v764
        %v769 = vadd.f32 %v743, %v765
        %v770 = vadd.f32 %v744, %v766
        %v771 = vadd.f32 %v745, %v767
        %v772 = vld [vmem:[%s480 + $0x1] sm:$0x1]
        %773 = vset.pattern.permute.xlu0 2
        %774 = vperm.xlu0 %773, %v690
        %v775 = vpop.permute.xlu0 %774
        %777 = vset.pattern.permute.xlu0 2
        %778 = vperm.xlu0 %777, %v691
        %v779 = vpop.permute.xlu0 %778
        %781 = vset.pattern.permute.xlu0 2
        %782 = vperm.xlu0 %781, %v692
        %v783 = vpop.permute.xlu0 %782
        %785 = vset.pattern.permute.xlu0 2
        %786 = vperm.xlu0 %785, %v693
        %v787 = vpop.permute.xlu0 %786
        %v789 = vperm.slane %v772, 0
        %v790 = vmul.f32 %v775, %v789
        %v791 = vmul.f32 %v779, %v789
        %v792 = vmul.f32 %v783, %v789
        %v793 = vmul.f32 %v787, %v789
        %v794 = vadd.f32 %v768, %v790
        %v795 = vadd.f32 %v769, %v791
        %v796 = vadd.f32 %v770, %v792
        %v797 = vadd.f32 %v771, %v793
        %vm798 = vcmp.ge.f32.partialorder %v794, 0.0
        %vm799 = vcmp.ge.f32.partialorder %v795, 0.0
        %vm800 = vcmp.ge.f32.partialorder %v796, 0.0
        %vm801 = vcmp.ge.f32.partialorder %v797, 0.0
        %v802 = vmul.f32 %v794, 0.2
        %v803 = vmul.f32 %v795, 0.2
        %v804 = vmul.f32 %v796, 0.2
        %v805 = vmul.f32 %v797, 0.2
        %v806 = vsel %vm798, %v794, %v802
        %v807 = vsel %vm799, %v795, %v803
        %v808 = vsel %vm800, %v796, %v804
        %v809 = vsel %vm801, %v797, %v805
        %v810 = vld [vmem:[%s9] sm:$0xff]
        %v811 = vld [vmem:[%s9 + $0x8] sm:$0xff]
        %v812 = vld [vmem:[%s9 + $0x10] sm:$0xff]
        %v813 = vld [vmem:[%s9 + $0x18] sm:$0xff]
        %815 = vset.pattern.permute.xlu0 0
        %816 = vperm.xlu0 %815, %v810
        %v817 = vpop.permute.xlu0 %816
        %820 = vset.pattern.permute.xlu0 0
        %821 = vperm.xlu0 %820, %v811
        %v822 = vpop.permute.xlu0 %821
        %825 = vset.pattern.permute.xlu0 0
        %826 = vperm.xlu0 %825, %v812
        %v827 = vpop.permute.xlu0 %826
        %830 = vset.pattern.permute.xlu0 0
        %831 = vperm.xlu0 %830, %v813
        %v832 = vpop.permute.xlu0 %831
        %v834 = vmul.f32 %v817, %v806
        %v835 = vmul.f32 %v822, %v807
        %v836 = vmul.f32 %v827, %v808
        %v837 = vmul.f32 %v832, %v809
        %v838 = vadd.f32 %v834, %v835
        %v839 = vadd.f32 %v838, %v836
        %v840 = vadd.f32 %v839, %v837
        %v841 = vrot.slane %v840, 4
        %v842 = vadd.f32 %v840, %v841
        %v843 = vrot.slane %v842, 2
        %v844 = vadd.f32 %v842, %v843
        %v845 = vrot.slane %v844, 1
        %v846 = vadd.f32 %v844, %v845
        %v847 = vtanh.pop %v846
        %v848 = vmul.f32 %v669, %v847
        %849 = vmatpush.xpose.msra.mxu0 %v584
        %850 = vmatpush.xpose.msra.mxu0 %v583
        %851 = vmatpush.xpose.msra.mxu0 %v582
        %852 = vmatpush.xpose.msra.mxu0 %v581
        %853 = vmatpush.xpose.msra.mxu0 %v580
        %854 = vmatpush.xpose.msra.mxu0 %v579
        %855 = vmatpush.xpose.msra.mxu0 %v578
        %856 = vmatpush.xpose.msra.mxu0 %v577
        %857 = vmatpush.xpose.msra.mxu0 %v576
        %858 = vmatpush.xpose.msra.mxu0 %v575
        %859 = vmatpush.xpose.msra.mxu0 %v574
        %860 = vmatpush.xpose.msra.mxu0 %v573
        %861 = vmatpush.xpose.msra.mxu0 %v572
        %862 = vmatpush.xpose.msra.mxu0 %v571
        %863 = vmatpush.xpose.msra.mxu0 %v570
        %864 = vmatpush.xpose.msra.mxu0 %v569
        %865 = vmatmul.f32.gmra.mxu0 %v848
        %v866 = vpop.f32.mrf.mxu0
        %v867 = vadd.f32 0.0, %v866
        %868 = vdwg.mxu0
        // Predicated region
        $region81: #{tpu_custom_call.1} parent=75 // pred_check
          %p869 = pneg %p481
        $region82: #{tpu_custom_call.1} parent=75 // pred_check_branch
          %871 = sbr.rel (%p869) target = $region84
        $region83: #{tpu_custom_call.1} parent=75 // pred_region
          %872 = vst [vmem:[#allocation4] sm:$0xff] %v867
        $region84: #{tpu_custom_call.1} parent=75 // pred_fallthru
          _
        %p873 = scmp.gt.s32.totalorder %s28, 0
        // Predicated region
        $region85: #{tpu_custom_call.1} parent=75 // pred_check
          %p874 = pneg %p873
        $region86: #{tpu_custom_call.1} parent=75 // pred_check_branch
          %876 = sbr.rel (%p874) target = $region88
        $region87: #{tpu_custom_call.1} parent=75 // pred_region
          %v877 = vld [vmem:[#allocation4] sm:$0xff]
          %v878 = vadd.f32 %v877, %v867
          %879 = vst [vmem:[#allocation4] sm:$0xff] %v878
        $region88: #{tpu_custom_call.1} parent=75 // pred_fallthru
          _
        %p880 = scmp.eq.s32.totalorder %s28, 1
        // Predicated region
        $region89: #{tpu_custom_call.1} parent=75 // pred_check
          %p881 = pneg %p880
        $region90: #{tpu_custom_call.1} parent=75 // pred_check_branch
          %883 = sbr.rel (%p881) target = $region92
        $region91: #{tpu_custom_call.1} parent=75 // pred_region
          %v884 = vld [vmem:[#allocation4] sm:$0xff]
          %v885 = vld [vmem:[%s6] sm:$0x1]
          %v887 = vperm.slane %v885, 0
          %v889 = vmul.f32 %v884, %v887
          %v890 = vld [vmem:[%s10] sm:$0xff]
          %v891 = vld [vmem:[%s10 + $0x8] sm:$0xff]
          %v892 = vld [vmem:[%s10 + $0x10] sm:$0xff]
          %v893 = vld [vmem:[%s10 + $0x18] sm:$0xff]
          %v894 = vld [vmem:[%s4] sm:$0x1]
          %896 = vset.pattern.permute.xlu0 0
          %897 = vperm.xlu0 %896, %v890
          %v898 = vpop.permute.xlu0 %897
          %901 = vset.pattern.permute.xlu0 0
          %902 = vperm.xlu0 %901, %v891
          %v903 = vpop.permute.xlu0 %902
          %906 = vset.pattern.permute.xlu0 0
          %907 = vperm.xlu0 %906, %v892
          %v908 = vpop.permute.xlu0 %907
          %911 = vset.pattern.permute.xlu0 0
          %912 = vperm.xlu0 %911, %v893
          %v913 = vpop.permute.xlu0 %912
          %v916 = vperm.slane %v894, 0
          %v918 = vmul.f32 %v898, %v916
          %v919 = vmul.f32 %v903, %v916
          %v920 = vmul.f32 %v908, %v916
          %v921 = vmul.f32 %v913, %v916
          %v922 = vld [vmem:[%s11] sm:$0xff]
          %v923 = vld [vmem:[%s11 + $0x8] sm:$0xff]
          %v924 = vld [vmem:[%s11 + $0x10] sm:$0xff]
          %v925 = vld [vmem:[%s11 + $0x18] sm:$0xff]
          %927 = vset.pattern.permute.xlu0 0
          %928 = vperm.xlu0 %927, %v922
          %v929 = vpop.permute.xlu0 %928
          %932 = vset.pattern.permute.xlu0 0
          %933 = vperm.xlu0 %932, %v923
          %v934 = vpop.permute.xlu0 %933
          %937 = vset.pattern.permute.xlu0 0
          %938 = vperm.xlu0 %937, %v924
          %v939 = vpop.permute.xlu0 %938
          %942 = vset.pattern.permute.xlu0 0
          %943 = vperm.xlu0 %942, %v925
          %v944 = vpop.permute.xlu0 %943
          %v946 = vadd.f32 %v918, %v929
          %v947 = vadd.f32 %v919, %v934
          %v948 = vadd.f32 %v920, %v939
          %v949 = vadd.f32 %v921, %v944
          %vm950 = vcmp.ge.f32.partialorder %v946, 0.0
          %vm951 = vcmp.ge.f32.partialorder %v947, 0.0
          %vm952 = vcmp.ge.f32.partialorder %v948, 0.0
          %vm953 = vcmp.ge.f32.partialorder %v949, 0.0
          %v954 = vmul.f32 %v946, 0.2
          %v955 = vmul.f32 %v947, 0.2
          %v956 = vmul.f32 %v948, 0.2
          %v957 = vmul.f32 %v949, 0.2
          %v958 = vsel %vm950, %v946, %v954
          %v959 = vsel %vm951, %v947, %v955
          %v960 = vsel %vm952, %v948, %v956
          %v961 = vsel %vm953, %v949, %v957
          %v962 = vld [vmem:[%s12] sm:$0xff]
          %v963 = vld [vmem:[%s12 + $0x8] sm:$0xff]
          %v964 = vld [vmem:[%s12 + $0x10] sm:$0xff]
          %v965 = vld [vmem:[%s12 + $0x18] sm:$0xff]
          %967 = vset.pattern.permute.xlu0 0
          %968 = vperm.xlu0 %967, %v962
          %v969 = vpop.permute.xlu0 %968
          %972 = vset.pattern.permute.xlu0 0
          %973 = vperm.xlu0 %972, %v963
          %v974 = vpop.permute.xlu0 %973
          %977 = vset.pattern.permute.xlu0 0
          %978 = vperm.xlu0 %977, %v964
          %v979 = vpop.permute.xlu0 %978
          %982 = vset.pattern.permute.xlu0 0
          %983 = vperm.xlu0 %982, %v965
          %v984 = vpop.permute.xlu0 %983
          %v986 = vmul.f32 %v969, %v958
          %v987 = vmul.f32 %v974, %v959
          %v988 = vmul.f32 %v979, %v960
          %v989 = vmul.f32 %v984, %v961
          %v990 = vadd.f32 %v986, %v987
          %v991 = vadd.f32 %v990, %v988
          %v992 = vadd.f32 %v991, %v989
          %v993 = vrot.slane %v992, 4
          %v994 = vadd.f32 %v992, %v993
          %v995 = vrot.slane %v994, 2
          %v996 = vadd.f32 %v994, %v995
          %v997 = vrot.slane %v996, 1
          %v998 = vadd.f32 %v996, %v997
          %v999 = vld [vmem:[#allocation3] sm:$0x1]
          %1001 = vset.pattern.permute.xlu0 0
          %1002 = vperm.xlu0 %1001, %v999
          %v1003 = vpop.permute.xlu0 %1002
          %v1005 = vperm.slane %v1003, 0
          %v1006 = vadd.f32 %v998, %v1005
          %v1007 = vadd.f32 %v518, %v889
          %v1008 = vld [vmem:[%s5] sm:$0xff]
          %v1009 = vmul.f32 %v1008, %v1006
          %v1010 = vadd.f32 %v1007, %v1009
          %1011 = vst [vmem:[#allocation4] sm:$0xff] %v1010
        $region92: #{tpu_custom_call.1} parent=75 // pred_fallthru
          _
        // Predicated region
        $region93: #{tpu_custom_call.1} parent=75 // pred_check
          %p1012 = pneg %p350
        $region94: #{tpu_custom_call.1} parent=75 // pred_check_branch
          %1014 = sbr.rel (%p1012) target = $region96
        $region95: #{tpu_custom_call.1} parent=75 // pred_region
          %1016 = vsyncadd [#allocation5], 0
          %s1018 = sshll.u32 [#allocation4], 4
          %s1019 = int_to_ptr.vmem [resolvable:$true] %s1018
          %s1020 = sshll.u32 %s14, 4
          %s1021 = int_to_ptr.hbm [resolvable:$true] %s1020
          %1023 = dma.vmem_to_hbm [thread:$0]  %s1019, 128, %s1021, [#allocation5]
        $region96: #{tpu_custom_call.1} parent=75 // pred_fallthru
          _
        // Predicated region
        $region97: #{tpu_custom_call.1} parent=75 // pred_check
          %p1024 = pneg %p350
        $region98: #{tpu_custom_call.1} parent=75 // pred_check_branch
          %1026 = sbr.rel (%p1024) target = $region100
        $region99: #{tpu_custom_call.1} parent=75 // pred_region
          %1028 = dma.done [#allocation5], 128
        $region100: #{tpu_custom_call.1} parent=75 // pred_fallthru
          _
      $region76: #{tpu_custom_call.1} parent=5 // pred_fallthru
        _
      %p1029 = scmp.le.s32.totalorder 2, %s23
      // Predicated region
      $region101: #{tpu_custom_call.1} parent=5 // pred_check
        %p1030 = pneg %p1029
      $region102: #{tpu_custom_call.1} parent=5 // pred_check_branch
        %1032 = sbr.rel (%p1030) target = $region104
      $region103: #{tpu_custom_call.1} parent=5 // pred_region
        %s1033 = ssub.s32 %s23, 2
      $region104: #{tpu_custom_call.1} parent=5 // pred_fallthru
        _
    $region6: #{tpu_custom_call.1} parent=1 // loop_footer
      %s27 = sadd.s32 1, %s23
    $region7: #{tpu_custom_call.1} parent=1 // loop_footer_branch
      %22 = sbr.rel target = $region3
    $region8: #{tpu_custom_call.1} parent=1 // loop_exit
      _
    %1034 = vsyncpa [#allocation5], 1
    %s1035 = scalar_lea.sflag [#allocation5], 1
    %1036 = vsyncpa %s1035, 1

</llo_original>
